<compile_context>
chip_gen: v5e
topology: v5e:2x2
jax: 0.10.0
libtpu: 0.0.40
codegen_flags: <defaults>
</compile_context>

<pallas_src>
import functools

import jax
import jax.numpy as jnp
from jax.experimental import pallas as pl
from jax.experimental.pallas import tpu as pltpu

_LANES = 1024                    # lane-dense granularity (8 sublanes x 128 lanes)
_SMALL_INPUT_THRESHOLD = 65536   # below this, plain jnp beats a kernel launch


def _fivepl_kernel(beta_ref, x_ref, o_ref):
    """Elementwise 5PL on one tile.  beta_ref: SMEM (5,) f32 [b1..b5]."""
    half_b1 = 0.5 * beta_ref[0]
    half_b2 = 0.5 * beta_ref[1]
    b3 = beta_ref[2]
    b4 = beta_ref[3]
    b5 = beta_ref[4]
    # Load in the native I/O dtype, do the math in f32 (v5e has no bf16 EUP).
    x = x_ref[...].astype(jnp.float32)
    # b1*(0.5 - 1/(1+exp(b2*(x-b3)))) == (0.5*b1) * tanh(0.5*b2*(x-b3))
    y = half_b1 * jnp.tanh(half_b2 * (x - b3)) + b4 * x + b5
    o_ref[...] = y.astype(o_ref.dtype)


@functools.lru_cache(maxsize=1)
def _chip_profile():
    """Generation-dependent tiling knobs (robust: falls back to defaults)."""
    kind = ""
    try:
        kind = jax.devices()[0].device_kind.lower()
    except Exception:  # pragma: no cover - never expected on a TPU backend
        pass
    is_v7 = "v7" in kind
    # Chips where one JAX device drives 2 TensorCores (grid>=2 lets both work).
    multi_core = is_v7 or ("v4" in kind) or ("v5p" in kind)
    tile_bytes = (8 << 20) if is_v7 else (4 << 20)
    return {"multi_core": multi_core, "tile_bytes": tile_bytes}


def _choose_tile_rows(R, itemsize, profile):
    """Rows per (rows, 1024) tile: ~tile_bytes, layout-friendly granularity."""
    bytes_per_row = _LANES * itemsize
    tm = max(1, profile["tile_bytes"] // bytes_per_row)
    tm = min(tm, R)
    g = 32 if R >= 32 else 8      # multiple of 32 covers f32/bf16/int8 packing
    if R > g:
        tm = max(g, (tm // g) * g)
        # Only split a fits-in-one-tile array when two TensorCores can use it.
        if profile["multi_core"] and tm >= R and R >= 2 * g:
            tm = max(g, (pl.cdiv(R, 2) // g) * g)
    else:
        tm = R                    # full-dim block is always legal for tiny R
    return tm


def _choose_tile_elems(n, itemsize, profile):
    """Elements per 1-D tile (multiple of 1024, or full extent)."""
    target = max(_LANES, profile["tile_bytes"] // itemsize)
    tile = (target // _LANES) * _LANES
    if tile >= n:
        if profile["multi_core"] and n >= 2 * _LANES:
            tile = max(_LANES, (pl.cdiv(n, 2) // _LANES) * _LANES)
        else:
            tile = n              # single full-extent block (always legal)
    return tile


def five_param_logistic(x, betas, *, use_pallas=None):
    """Apply the 5PL mapping elementwise to an arbitrary-shaped array.

    Args:
      x: float array of any shape (predicted quality scores).
      betas: array-like of shape (5,) = [beta1..beta5].
      use_pallas: None = auto (jnp fast path for small inputs), True/False to force.
    Returns:
      Array of the same shape as x (mapped MOS scores), same dtype for floating
      inputs (non-floating inputs are promoted to float32).
    """
    orig_shape = x.shape
    orig_dtype = x.dtype
    betas_f32 = jnp.asarray(betas, dtype=jnp.float32).reshape(5)

    if jnp.issubdtype(orig_dtype, jnp.floating):
        io_dtype = orig_dtype
        flat = x.reshape(-1)                    # free (layout-preserving)
    else:
        io_dtype = jnp.float32
        flat = x.astype(jnp.float32).reshape(-1)

    n = flat.shape[0]
    if use_pallas is None:
        use_pallas = n >= _SMALL_INPUT_THRESHOLD

    if not use_pallas or n == 0:
        # Small-input fast path: one fused XLA elementwise op, no launch cost.
        xf = flat.astype(jnp.float32)
        y = ((0.5 * betas_f32[0]) * jnp.tanh((0.5 * betas_f32[1]) * (xf - betas_f32[2]))
             + betas_f32[3] * xf + betas_f32[4])
        return y.astype(io_dtype).reshape(orig_shape)

    profile = _chip_profile()
    itemsize = jnp.dtype(io_dtype).itemsize
    compiler_params = pltpu.CompilerParams(
        dimension_semantics=("parallel",),
        vmem_limit_bytes=48 << 20,  # load-bearing on v5e (16 MiB default scope)
    )

    if n % _LANES == 0:
        # Zero-copy lane-dense 2-D path: (R, 1024), full-width unmasked stores.
        R = n // _LANES
        x2d = flat.reshape(R, _LANES)           # free reshape
        tm = _choose_tile_rows(R, itemsize, profile)
        y2d = pl.pallas_call(
            _fivepl_kernel,
            out_shape=jax.ShapeDtypeStruct((R, _LANES), io_dtype),
            grid_spec=pl.GridSpec(
                grid=(pl.cdiv(R, tm),),
                in_specs=[
                    pl.BlockSpec(memory_space=pltpu.SMEM),           # betas
                    pl.BlockSpec((tm, _LANES), lambda i: (i, 0)),    # x tile
                ],
                out_specs=pl.BlockSpec((tm, _LANES), lambda i: (i, 0)),
            ),
            compiler_params=compiler_params,
        )(betas_f32, x2d)
        y = y2d.reshape(orig_shape)
    else:
        # Ragged path: grid the flat 1-D array directly; Pallas masks the
        # partial edge block.  No jnp.pad and no trailing slice -> no extra
        # full-array HBM passes.
        tile = _choose_tile_elems(n, itemsize, profile)
        y1d = pl.pallas_call(
            _fivepl_kernel,
            out_shape=jax.ShapeDtypeStruct((n,), io_dtype),
            grid_spec=pl.GridSpec(
                grid=(pl.cdiv(n, tile),),
                in_specs=[
                    pl.BlockSpec(memory_space=pltpu.SMEM),           # betas
                    pl.BlockSpec((tile,), lambda i: (i,)),           # x block
                ],
                out_specs=pl.BlockSpec((tile,), lambda i: (i,)),
            ),
            compiler_params=compiler_params,
        )(betas_f32, flat)
        y = y1d.reshape(orig_shape)

    return y


def five_param_logistic_ref(x, betas):
    """Pure-jnp reference matching the PyTorch forward exactly (f32 math)."""
    b = jnp.asarray(betas, dtype=jnp.float32)
    xf = x.astype(jnp.float32)
    return b[0] * (0.5 - 1.0 / (1.0 + jnp.exp(b[1] * (xf - b[2])))) + b[3] * xf + b[4]


if __name__ == "__main__":
    key = jax.random.PRNGKey(0)
    k1, k2, k3, k4 = jax.random.split(key, 4)

    # Module defaults: beta1=1, beta2=1, beta3=0, beta4=1, beta5=1
    betas_default = jnp.array([1.0, 1.0, 0.0, 1.0, 1.0], dtype=jnp.float32)
    # Non-trivial "fitted" parameters.
    betas_fit = jnp.array([2.5, 0.7, 1.3, 0.05, 3.0], dtype=jnp.float32)

    # Case 1: small 4-D batch of predicted quality scores, forced through the
    # Pallas kernel (the auto path would take the jnp fast path at this size).
    x1 = jax.random.uniform(k1, (2, 4, 16, 16), dtype=jnp.float32) * 10.0 - 5.0
    y1 = jax.block_until_ready(five_param_logistic(x1, betas_default, use_pallas=True))
    assert y1.shape == x1.shape and y1.dtype == x1.dtype
    assert jnp.allclose(y1, five_param_logistic_ref(x1, betas_default), atol=1e-5, rtol=1e-5)
    y1_auto = jax.block_until_ready(five_param_logistic(x1, betas_default))
    assert jnp.allclose(y1_auto, y1, atol=1e-5, rtol=1e-5)

    # Case 2: lane-aligned size (multiple of 1024) -> zero-copy 2-D path.
    x2 = jax.random.normal(k2, (64, 1024), dtype=jnp.float32) * 3.0
    y2 = jax.block_until_ready(five_param_logistic(x2, betas_fit))
    assert jnp.allclose(y2, five_param_logistic_ref(x2, betas_fit), atol=1e-5, rtol=1e-5)

    # Case 3: ragged size (not a multiple of 1024) -> 1-D path, masked edge, no pad/slice.
    x3 = jax.random.normal(k3, (7, 555), dtype=jnp.float32) * 2.0
    y3 = jax.block_until_ready(five_param_logistic(x3, betas_fit, use_pallas=True))
    assert jnp.allclose(y3, five_param_logistic_ref(x3, betas_fit), atol=1e-5, rtol=1e-5)

    # Case 4: bf16 input -> native-dtype DMA, f32 math inside the kernel.
    x4 = (jax.random.normal(k4, (32, 1024), dtype=jnp.float32) * 3.0).astype(jnp.bfloat16)
    y4 = jax.block_until_ready(five_param_logistic(x4, betas_fit, use_pallas=True))
    assert y4.dtype == jnp.bfloat16 and y4.shape == x4.shape
    assert jnp.allclose(y4.astype(jnp.float32), five_param_logistic_ref(x4, betas_fit),
                        atol=1e-1, rtol=2e-2)

    print("KERNEL_OK")
</pallas_src>

<mosaic_0001>
module attributes {stable_mosaic.version = 11 : i64} {
  func.func @_fivepl_kernel(%arg0: i32, %arg1: memref<5xf32, #tpu.memory_space<smem>>, %arg2: memref<2x1024xf32, #tpu.memory_space<vmem>>, %arg3: memref<2x1024xf32, #tpu.memory_space<vmem>>) attributes {dimension_semantics = [#tpu.dimension_semantics<parallel>], iteration_bounds = array<i64: 1>, scalar_prefetch = 0 : i64, scratch_operands = 0 : i64, tpu.core_type = #tpu.core_type<tc>, window_params = [{transform_indices = @transform_0, window_bounds = array<i64: 5>}, {transform_indices = @transform_1, window_bounds = array<i64: 2, 1024>}, {transform_indices = @transform_2, window_bounds = array<i64: 2, 1024>}]} {
    %c0 = arith.constant 0 : index
    %0 = memref.load %arg1[%c0] : memref<5xf32, #tpu.memory_space<smem>>
    %cst = arith.constant 5.000000e-01 : f32
    %1 = arith.mulf %cst, %0 : f32
    %c1 = arith.constant 1 : index
    %2 = memref.load %arg1[%c1] : memref<5xf32, #tpu.memory_space<smem>>
    %cst_0 = arith.constant 5.000000e-01 : f32
    %3 = arith.mulf %cst_0, %2 : f32
    %c2 = arith.constant 2 : index
    %4 = memref.load %arg1[%c2] : memref<5xf32, #tpu.memory_space<smem>>
    %c3 = arith.constant 3 : index
    %5 = memref.load %arg1[%c3] : memref<5xf32, #tpu.memory_space<smem>>
    %c4 = arith.constant 4 : index
    %6 = memref.load %arg1[%c4] : memref<5xf32, #tpu.memory_space<smem>>
    %c0_1 = arith.constant 0 : index
    %c0_2 = arith.constant 0 : index
    %7 = vector.load %arg2[%c0_1, %c0_2] : memref<2x1024xf32, #tpu.memory_space<vmem>>, vector<2x1024xf32>
    %8 = vector.broadcast %4 : f32 to vector<2x1024xf32>
    %9 = arith.subf %7, %8 : vector<2x1024xf32>
    %10 = vector.broadcast %3 : f32 to vector<2x1024xf32>
    %11 = arith.mulf %10, %9 : vector<2x1024xf32>
    %12 = math.tanh %11 : vector<2x1024xf32>
    %13 = vector.broadcast %1 : f32 to vector<2x1024xf32>
    %14 = arith.mulf %13, %12 : vector<2x1024xf32>
    %15 = vector.broadcast %5 : f32 to vector<2x1024xf32>
    %16 = arith.mulf %15, %7 : vector<2x1024xf32>
    %17 = arith.addf %14, %16 : vector<2x1024xf32>
    %18 = vector.broadcast %6 : f32 to vector<2x1024xf32>
    %19 = arith.addf %17, %18 : vector<2x1024xf32>
    %c0_3 = arith.constant 0 : index
    %c0_4 = arith.constant 0 : index
    %20 = vector.load %arg3[%c0_3, %c0_4] : memref<2x1024xf32, #tpu.memory_space<vmem>>, vector<2x1024xf32>
    tpu.vector_store %arg3[%c0_3, %c0_4], %19 {strides = array<i32>} : memref<2x1024xf32, #tpu.memory_space<vmem>>, vector<2x1024xf32>,
    return
  }
  func.func @transform_0(%arg0: i32) -> i32 {
    %c0_i32 = arith.constant 0 : i32
    %c0_i32_0 = arith.constant 0 : i32
    return %c0_i32 : i32
  }
  func.func @transform_1(%arg0: i32) -> (i32, i32) {
    %c0_i32 = arith.constant 0 : i32
    %c0_i32_0 = arith.constant 0 : i32
    return %arg0, %c0_i32 : i32, i32
  }
  func.func @transform_2(%arg0: i32) -> (i32, i32) {
    %c0_i32 = arith.constant 0 : i32
    %c0_i32_0 = arith.constant 0 : i32
    return %arg0, %c0_i32 : i32, i32
  }
}

</mosaic_0001>

<llo_original>
// kernel: tpu_custom_call.1
$region0: #{tpu_custom_call.1}
  #allocation0 [shape = 'u32[]', space=smem, size = 0x4, offset = 0x4, fixed_abs, tag = 'smem constant byte address 0x4 - core index']
  #allocation1 [shape = 'u32[72,128]{1,0:T(1,128)}', space=vmem, size = 0x9000, scoped, tag = 'internal scratch']
  %s0 = inlined_call_operand.hbm [shape: f32[5], index: 0, kind: input, shape index: {}]
  %s1 = inlined_call_operand.hbm [shape: f32[2,1024], index: 1, kind: input, shape index: {}]
  %s2 = inlined_call_operand.hbm [shape: f32[2,1024], index: 2, kind: output, shape index: {}]
  %s3 = sld [smem:[#allocation0]]
  $region26: #{tpu_custom_call.1} parent=0
    _
  %s5 = ssub.s32 1, %s3
  %s6 = scalar_select 0, %s5, %s3
  $region1: #{tpu_custom_call.1} parent=0
    #allocation2 [shape = 'u8[512]{0}', space=smem, size = 0x200, scoped, tag = 'input window, operand 0, single buffered']
    #allocation3 [shape = 's32[1]{0}', space=sflag, size = 0x4, scoped, tag = 'scoped memory for tpu_custom_call.1']
    #allocation4 [shape = 's32[1]{0}', space=sflag, size = 0x4, scoped, tag = 'scoped memory for tpu_custom_call.1']
    #allocation5 [shape = 's32[1]{0}', space=sflag, size = 0x4, scoped, tag = 'scoped memory for tpu_custom_call.1']
    #allocation6 [shape = 'u8[8192]{0}', space=vmem, size = 0x2000, scoped, tag = 'input window, operand 1, single buffered']
    #allocation7 [shape = 'u8[8192]{0}', space=vmem, size = 0x2000, scoped, tag = 'output window, operand 0, single buffered']
    %7 = vsyncpa [#allocation5], 0
    %8 = vsyncpa [#allocation3], 0
    %9 = vsyncpa [#allocation4], 0
    // Predicated region
    $region2: #{tpu_custom_call.1} parent=1 // pred_check
      _
    $region3: #{tpu_custom_call.1} parent=1 // pred_check_branch
      %11 = sbr.rel (0) target = $region5
    $region4: #{tpu_custom_call.1} parent=1 // pred_region
      %13 = vsyncadd [#allocation5], 0
      %s15 = sshll.u32 %s0, 4
      %s16 = int_to_ptr.hbm [resolvable:$true] %s15
      %18 = dma.hbm_to_smem %s16, 16, [#allocation2], [#allocation5]
    $region5: #{tpu_custom_call.1} parent=1 // pred_fallthru
      _
    // Predicated region
    $region6: #{tpu_custom_call.1} parent=1 // pred_check
      _
    $region7: #{tpu_custom_call.1} parent=1 // pred_check_branch
      %20 = sbr.rel (0) target = $region9
    $region8: #{tpu_custom_call.1} parent=1 // pred_region
      %22 = vsyncadd [#allocation3], 0
      %s24 = sshll.u32 %s1, 4
      %s25 = int_to_ptr.hbm [resolvable:$true] %s24
      %s26 = sshll.u32 [#allocation6], 4
      %s27 = int_to_ptr.vmem [resolvable:$true] %s26
      %29 = dma.hbm_to_vmem [thread:$0]  %s25, 256, %s27, [#allocation3]
    $region9: #{tpu_custom_call.1} parent=1 // pred_fallthru
      _
    // Predicated region
    $region10: #{tpu_custom_call.1} parent=1 // pred_check
      _
    $region11: #{tpu_custom_call.1} parent=1 // pred_check_branch
      %31 = sbr.rel (0) target = $region13
    $region12: #{tpu_custom_call.1} parent=1 // pred_region
      %33 = dma.done [#allocation5], 16
    $region13: #{tpu_custom_call.1} parent=1 // pred_fallthru
      _
    // Predicated region
    $region14: #{tpu_custom_call.1} parent=1 // pred_check
      _
    $region15: #{tpu_custom_call.1} parent=1 // pred_check_branch
      %35 = sbr.rel (0) target = $region17
    $region16: #{tpu_custom_call.1} parent=1 // pred_region
      %37 = dma.done [#allocation3], 256
    $region17: #{tpu_custom_call.1} parent=1 // pred_fallthru
      _
    %38 = sfence
    %s39 = sld [smem:[#allocation2]]
    %s40 = smul.f32 %s39, 0.5
    %s41 = sld [smem:[#allocation2 + $0x1]]
    %s42 = smul.f32 %s41, 0.5
    %s43 = sld [smem:[#allocation2 + $0x2]]
    %s44 = sld [smem:[#allocation2 + $0x3]]
    %s45 = sld [smem:[#allocation2 + $0x4]]
    %v46 = vld [vmem:[#allocation6] sm:$0xff]
    %v47 = vld [vmem:[#allocation6 + $0x8] sm:$0xff]
    %v48 = vstv %s43
    %v49 = vsub.f32 %v46, %v48
    %v50 = vsub.f32 %v47, %v48
    %v51 = vstv %s42
    %v52 = vmul.f32 %v51, %v49
    %v53 = vmul.f32 %v51, %v50
    %v54 = vtanh.pop %v52
    %v55 = vtanh.pop %v53
    %v56 = vstv %s40
    %v57 = vmul.f32 %v56, %v54
    %v58 = vmul.f32 %v56, %v55
    %v59 = vstv %s44
    %v60 = vmul.f32 %v59, %v46
    %v61 = vmul.f32 %v59, %v47
    %v62 = vadd.f32 %v57, %v60
    %v63 = vadd.f32 %v58, %v61
    %v64 = vstv %s45
    %v65 = vadd.f32 %v62, %v64
    %v66 = vadd.f32 %v63, %v64
    %67 = vst [vmem:[#allocation7] sm:$0xff] %v65
    %68 = vst [vmem:[#allocation7 + $0x8] sm:$0xff] %v66
    // Predicated region
    $region18: #{tpu_custom_call.1} parent=1 // pred_check
      _
    $region19: #{tpu_custom_call.1} parent=1 // pred_check_branch
      %70 = sbr.rel (0) target = $region21
    $region20: #{tpu_custom_call.1} parent=1 // pred_region
      %72 = vsyncadd [#allocation4], 0
      %s74 = sshll.u32 [#allocation7], 4
      %s75 = int_to_ptr.vmem [resolvable:$true] %s74
      %s76 = sshll.u32 %s2, 4
      %s77 = int_to_ptr.hbm [resolvable:$true] %s76
      %79 = dma.vmem_to_hbm [thread:$0]  %s75, 256, %s77, [#allocation4]
    $region21: #{tpu_custom_call.1} parent=1 // pred_fallthru
      _
    // Predicated region
    $region22: #{tpu_custom_call.1} parent=1 // pred_check
      _
    $region23: #{tpu_custom_call.1} parent=1 // pred_check_branch
      %81 = sbr.rel (0) target = $region25
    $region24: #{tpu_custom_call.1} parent=1 // pred_region
      %83 = dma.done [#allocation4], 256
    $region25: #{tpu_custom_call.1} parent=1 // pred_fallthru
      _
    %84 = vsyncpa [#allocation3], 1
    %85 = vsyncpa [#allocation4], 1
    %86 = vsyncpa [#allocation5], 1

</llo_original>
